<compile_context>
chip_gen: v6e
topology: v6e:2x2x1
jax: 0.10.0
libtpu: 0.0.40
codegen_flags: <defaults>
</compile_context>

<pallas_src>
import jax
import jax.numpy as jnp
from jax.experimental import pallas as pl
from jax.experimental.pallas import tpu as pltpu


def _round_up(x, m):
    return (x + m - 1) // m * m


def debugnet0_kernel(w1_ref, w2_ref, x_ref, out_ref):
    """One N-tile of DebugNet0.

    w1_ref : (1, 1)  SMEM       -- conv1 1x1 weight (scalar).
    w2_ref : (2, 4)  SMEM       -- conv2 weights, w2[c, kh*2 + kw].
    x_ref  : (16, TILE_N) VMEM  -- row r = h*4 + w of the 4x4 image; batch on lanes.
    out_ref: (18, TILE_N) VMEM  -- row = c*9 + oh*3 + ow  (== PyTorch .view(-1, 18)).
    """
    # conv1 (1x1, single scalar weight, no bias) + ReLU, lane-parallel over batch.
    h = jnp.maximum(x_ref[...] * w1_ref[0, 0], 0.0)          # (16, TILE_N) f32

    # For conv2 tap (kh, kw): output position p = oh*3 + ow reads input row
    # (oh + kh)*4 + (ow + kw).  Gather the 9 rows with static sublane slices.
    def window(kh, kw):
        base = kh * 4 + kw
        return jnp.concatenate(
            [h[base + 0: base + 3, :],
             h[base + 4: base + 7, :],
             h[base + 8: base + 11, :]], axis=0)              # (9, TILE_N)

    wins = [window(kh, kw) for kh in range(2) for kw in range(2)]

    # conv2 (1 -> 2 channels, 2x2 kernel, no bias) + ReLU; scalar weights from
    # SMEM broadcast once per (channel, tap) against the full (9, TILE_N) slab.
    for c in range(2):
        acc = wins[0] * w2_ref[c, 0]
        for k in range(1, 4):
            acc = acc + wins[k] * w2_ref[c, k]
        out_ref[c * 9:(c + 1) * 9, :] = jnp.maximum(acc, 0.0)


def debugnet0_forward(x, w1, w2, *, tile_n=8192):
    """x: (N, 1, 4, 4) float32 NCHW.  Returns (N, 18), matching DebugNet0.forward."""
    assert x.shape[1] == 1 and x.shape[2] == 4 and x.shape[3] == 4
    assert tile_n % 128 == 0
    n = x.shape[0]

    # Layout glue (plain JAX): 16 pixels on sublanes, batch on lanes.
    x_t = jnp.transpose(x.reshape(n, 16)).astype(jnp.float32)   # (16, N)
    tile = min(tile_n, _round_up(max(n, 1), 128))
    n_pad = _round_up(n, tile)
    if n_pad != n:
        x_t = jnp.pad(x_t, ((0, 0), (0, n_pad - n)))

    out_t = pl.pallas_call(
        debugnet0_kernel,
        out_shape=jax.ShapeDtypeStruct((18, n_pad), jnp.float32),
        grid=(n_pad // tile,),
        in_specs=[
            pl.BlockSpec(memory_space=pltpu.SMEM),               # w1 (1, 1)
            pl.BlockSpec(memory_space=pltpu.SMEM),               # w2 (2, 4)
            pl.BlockSpec((16, tile), lambda i: (0, i)),          # images
        ],
        out_specs=pl.BlockSpec((18, tile), lambda i: (0, i)),
        compiler_params=pltpu.CompilerParams(
            dimension_semantics=("parallel",)),
    )(w1, w2, x_t)

    return jnp.transpose(out_t)[:n]                              # (N, 18)


def debugnet0_reference(x, w1, w2):
    # Pure-JAX reference mirroring the PyTorch forward (bias=False on both convs).
    w1_full = w1.reshape(1, 1, 1, 1)          # (O=1, I=1, 1, 1)
    w2_full = w2.reshape(2, 1, 2, 2)          # (O=2, I=1, 2, 2)
    h = jax.lax.conv_general_dilated(
        x, w1_full, window_strides=(1, 1), padding="VALID",
        dimension_numbers=("NCHW", "OIHW", "NCHW"))
    h = jnp.maximum(h, 0.0)
    y = jax.lax.conv_general_dilated(
        h, w2_full, window_strides=(1, 1), padding="VALID",
        dimension_numbers=("NCHW", "OIHW", "NCHW"))
    y = jnp.maximum(y, 0.0)                   # (N, 2, 3, 3)
    return y.reshape(-1, 18)


if __name__ == "__main__":
    # Deterministic parameters, exactly as in DebugNet0.__init__
    w1 = jnp.ones((1, 1), dtype=jnp.float32)                      # conv1.weight = 1.0
    w2 = jnp.arange(2 * 2 * 2, dtype=jnp.float32).reshape(2, 4)   # conv2.weight = arange(8)

    # Deterministic example input (N, 1, 4, 4), matching the module's asserts.
    key = jax.random.PRNGKey(0)
    x = jax.random.normal(key, (2, 1, 4, 4), dtype=jnp.float32)

    out = jax.block_until_ready(debugnet0_forward(x, w1, w2))
    ref = debugnet0_reference(x, w1, w2)
    assert out.shape == (2, 18)
    assert jnp.allclose(out, ref, atol=1e-5, rtol=1e-5), (out, ref)

    # Exercise the multi-tile pipelined path (grid > 1, padded lane axis).
    key2 = jax.random.PRNGKey(1)
    xl = jax.random.normal(key2, (260, 1, 4, 4), dtype=jnp.float32)
    outl = jax.block_until_ready(debugnet0_forward(xl, w1, w2, tile_n=128))
    refl = debugnet0_reference(xl, w1, w2)
    assert outl.shape == (260, 18)
    assert jnp.allclose(outl, refl, atol=1e-5, rtol=1e-5)

    print("KERNEL_OK")
</pallas_src>

<mosaic_0001>
module attributes {stable_mosaic.version = 11 : i64} {
  func.func @debugnet0_kernel(%arg0: i32, %arg1: memref<1x1xf32, #tpu.memory_space<smem>>, %arg2: memref<2x4xf32, #tpu.memory_space<smem>>, %arg3: memref<16x128xf32, #tpu.memory_space<vmem>>, %arg4: memref<18x128xf32, #tpu.memory_space<vmem>>) attributes {dimension_semantics = [#tpu.dimension_semantics<parallel>], iteration_bounds = array<i64: 1>, scalar_prefetch = 0 : i64, scratch_operands = 0 : i64, tpu.core_type = #tpu.core_type<tc>, window_params = [{transform_indices = @transform_0, window_bounds = array<i64: 1, 1>}, {transform_indices = @transform_1, window_bounds = array<i64: 2, 4>}, {transform_indices = @transform_2, window_bounds = array<i64: 16, 128>}, {transform_indices = @transform_3, window_bounds = array<i64: 18, 128>}]} {
    %c0 = arith.constant 0 : index
    %c0_0 = arith.constant 0 : index
    %0 = vector.load %arg3[%c0, %c0_0] : memref<16x128xf32, #tpu.memory_space<vmem>>, vector<16x128xf32>
    %c0_1 = arith.constant 0 : index
    %c0_2 = arith.constant 0 : index
    %1 = memref.load %arg1[%c0_1, %c0_2] : memref<1x1xf32, #tpu.memory_space<smem>>
    %2 = vector.broadcast %1 : f32 to vector<16x128xf32>
    %3 = arith.mulf %0, %2 : vector<16x128xf32>
    %cst = arith.constant 0.000000e+00 : f32
    %4 = vector.broadcast %cst : f32 to vector<16x128xf32>
    %5 = arith.maximumf %3, %4 : vector<16x128xf32>
    %6 = vector.extract_strided_slice %5 {offsets = [0, 0], sizes = [3, 128], strides = [1, 1]} : vector<16x128xf32> to vector<3x128xf32>
    %7 = vector.extract_strided_slice %5 {offsets = [4, 0], sizes = [3, 128], strides = [1, 1]} : vector<16x128xf32> to vector<3x128xf32>
    %8 = vector.extract_strided_slice %5 {offsets = [8, 0], sizes = [3, 128], strides = [1, 1]} : vector<16x128xf32> to vector<3x128xf32>
    %9 = tpu.concatenate %6, %7, %8 in 0 : vector<3x128xf32>, vector<3x128xf32>, vector<3x128xf32> -> vector<9x128xf32>
    %10 = vector.extract_strided_slice %5 {offsets = [1, 0], sizes = [3, 128], strides = [1, 1]} : vector<16x128xf32> to vector<3x128xf32>
    %11 = vector.extract_strided_slice %5 {offsets = [5, 0], sizes = [3, 128], strides = [1, 1]} : vector<16x128xf32> to vector<3x128xf32>
    %12 = vector.extract_strided_slice %5 {offsets = [9, 0], sizes = [3, 128], strides = [1, 1]} : vector<16x128xf32> to vector<3x128xf32>
    %13 = tpu.concatenate %10, %11, %12 in 0 : vector<3x128xf32>, vector<3x128xf32>, vector<3x128xf32> -> vector<9x128xf32>
    %14 = vector.extract_strided_slice %5 {offsets = [4, 0], sizes = [3, 128], strides = [1, 1]} : vector<16x128xf32> to vector<3x128xf32>
    %15 = vector.extract_strided_slice %5 {offsets = [8, 0], sizes = [3, 128], strides = [1, 1]} : vector<16x128xf32> to vector<3x128xf32>
    %16 = vector.extract_strided_slice %5 {offsets = [12, 0], sizes = [3, 128], strides = [1, 1]} : vector<16x128xf32> to vector<3x128xf32>
    %17 = tpu.concatenate %14, %15, %16 in 0 : vector<3x128xf32>, vector<3x128xf32>, vector<3x128xf32> -> vector<9x128xf32>
    %18 = vector.extract_strided_slice %5 {offsets = [5, 0], sizes = [3, 128], strides = [1, 1]} : vector<16x128xf32> to vector<3x128xf32>
    %19 = vector.extract_strided_slice %5 {offsets = [9, 0], sizes = [3, 128], strides = [1, 1]} : vector<16x128xf32> to vector<3x128xf32>
    %20 = vector.extract_strided_slice %5 {offsets = [13, 0], sizes = [3, 128], strides = [1, 1]} : vector<16x128xf32> to vector<3x128xf32>
    %21 = tpu.concatenate %18, %19, %20 in 0 : vector<3x128xf32>, vector<3x128xf32>, vector<3x128xf32> -> vector<9x128xf32>
    %c0_3 = arith.constant 0 : index
    %c0_4 = arith.constant 0 : index
    %22 = memref.load %arg2[%c0_3, %c0_4] : memref<2x4xf32, #tpu.memory_space<smem>>
    %23 = vector.broadcast %22 : f32 to vector<9x128xf32>
    %24 = arith.mulf %9, %23 : vector<9x128xf32>
    %c0_5 = arith.constant 0 : index
    %c1 = arith.constant 1 : index
    %25 = memref.load %arg2[%c0_5, %c1] : memref<2x4xf32, #tpu.memory_space<smem>>
    %26 = vector.broadcast %25 : f32 to vector<9x128xf32>
    %27 = arith.mulf %13, %26 : vector<9x128xf32>
    %28 = arith.addf %24, %27 : vector<9x128xf32>
    %c0_6 = arith.constant 0 : index
    %c2 = arith.constant 2 : index
    %29 = memref.load %arg2[%c0_6, %c2] : memref<2x4xf32, #tpu.memory_space<smem>>
    %30 = vector.broadcast %29 : f32 to vector<9x128xf32>
    %31 = arith.mulf %17, %30 : vector<9x128xf32>
    %32 = arith.addf %28, %31 : vector<9x128xf32>
    %c0_7 = arith.constant 0 : index
    %c3 = arith.constant 3 : index
    %33 = memref.load %arg2[%c0_7, %c3] : memref<2x4xf32, #tpu.memory_space<smem>>
    %34 = vector.broadcast %33 : f32 to vector<9x128xf32>
    %35 = arith.mulf %21, %34 : vector<9x128xf32>
    %36 = arith.addf %32, %35 : vector<9x128xf32>
    %cst_8 = arith.constant 0.000000e+00 : f32
    %37 = vector.broadcast %cst_8 : f32 to vector<9x128xf32>
    %38 = arith.maximumf %36, %37 : vector<9x128xf32>
    %c0_9 = arith.constant 0 : index
    %c0_10 = arith.constant 0 : index
    %39 = vector.load %arg4[%c0_9, %c0_10] : memref<18x128xf32, #tpu.memory_space<vmem>>, vector<9x128xf32>
    tpu.vector_store %arg4[%c0_9, %c0_10], %38 {strides = array<i32>} : memref<18x128xf32, #tpu.memory_space<vmem>>, vector<9x128xf32>,
    %c1_11 = arith.constant 1 : index
    %c0_12 = arith.constant 0 : index
    %40 = memref.load %arg2[%c1_11, %c0_12] : memref<2x4xf32, #tpu.memory_space<smem>>
    %41 = vector.broadcast %40 : f32 to vector<9x128xf32>
    %42 = arith.mulf %9, %41 : vector<9x128xf32>
    %c1_13 = arith.constant 1 : index
    %c1_14 = arith.constant 1 : index
    %43 = memref.load %arg2[%c1_13, %c1_14] : memref<2x4xf32, #tpu.memory_space<smem>>
    %44 = vector.broadcast %43 : f32 to vector<9x128xf32>
    %45 = arith.mulf %13, %44 : vector<9x128xf32>
    %46 = arith.addf %42, %45 : vector<9x128xf32>
    %c1_15 = arith.constant 1 : index
    %c2_16 = arith.constant 2 : index
    %47 = memref.load %arg2[%c1_15, %c2_16] : memref<2x4xf32, #tpu.memory_space<smem>>
    %48 = vector.broadcast %47 : f32 to vector<9x128xf32>
    %49 = arith.mulf %17, %48 : vector<9x128xf32>
    %50 = arith.addf %46, %49 : vector<9x128xf32>
    %c1_17 = arith.constant 1 : index
    %c3_18 = arith.constant 3 : index
    %51 = memref.load %arg2[%c1_17, %c3_18] : memref<2x4xf32, #tpu.memory_space<smem>>
    %52 = vector.broadcast %51 : f32 to vector<9x128xf32>
    %53 = arith.mulf %21, %52 : vector<9x128xf32>
    %54 = arith.addf %50, %53 : vector<9x128xf32>
    %cst_19 = arith.constant 0.000000e+00 : f32
    %55 = vector.broadcast %cst_19 : f32 to vector<9x128xf32>
    %56 = arith.maximumf %54, %55 : vector<9x128xf32>
    %c9 = arith.constant 9 : index
    %c0_20 = arith.constant 0 : index
    %57 = vector.load %arg4[%c9, %c0_20] : memref<18x128xf32, #tpu.memory_space<vmem>>, vector<9x128xf32>
    tpu.vector_store %arg4[%c9, %c0_20], %56 {strides = array<i32>} : memref<18x128xf32, #tpu.memory_space<vmem>>, vector<9x128xf32>,
    return
  }
  func.func @transform_0(%arg0: i32) -> (i32, i32) {
    %c0_i32 = arith.constant 0 : i32
    %c0_i32_0 = arith.constant 0 : i32
    %c0_i32_1 = arith.constant 0 : i32
    return %c0_i32, %c0_i32_0 : i32, i32
  }
  func.func @transform_1(%arg0: i32) -> (i32, i32) {
    %c0_i32 = arith.constant 0 : i32
    %c0_i32_0 = arith.constant 0 : i32
    %c0_i32_1 = arith.constant 0 : i32
    return %c0_i32, %c0_i32_0 : i32, i32
  }
  func.func @transform_2(%arg0: i32) -> (i32, i32) {
    %c0_i32 = arith.constant 0 : i32
    %c0_i32_0 = arith.constant 0 : i32
    return %c0_i32, %arg0 : i32, i32
  }
  func.func @transform_3(%arg0: i32) -> (i32, i32) {
    %c0_i32 = arith.constant 0 : i32
    %c0_i32_0 = arith.constant 0 : i32
    return %c0_i32, %arg0 : i32, i32
  }
}

</mosaic_0001>

<llo_original>
// kernel: tpu_custom_call.1
$region0: #{tpu_custom_call.1}
  #allocation0 [shape = 'u32[]', space=smem, size = 0x4, offset = 0x4, fixed_abs, tag = 'smem constant byte address 0x4 - core index']
  #allocation1 [shape = 'u32[144,128]{1,0:T(1,128)}', space=vmem, size = 0x12000, scoped, tag = 'internal scratch']
  #allocation2 [shape = 'f32[1,1]{1,0:T(1,128)S(6)}', space=smem, size = 0x200, scoped, tag = 'scoped memory for tpu_custom_call.1']
  %s0 = inlined_call_operand.<no memory space> [shape: f32[1,1], index: 0, kind: input, shape index: {}]
  %s1 = inlined_call_operand.vmem [shape: f32[2,4], index: 1, kind: input, shape index: {}]
  %s2 = inlined_call_operand.hbm [shape: f32[16,128], index: 2, kind: input, shape index: {}]
  %s3 = inlined_call_operand.hbm [shape: f32[18,128], index: 3, kind: output, shape index: {}]
  %s4 = sld [smem:[#allocation0]]
  $region30: #{tpu_custom_call.1} parent=0
    _
  %s6 = ssub.s32 1, %s4
  %s7 = scalar_select 0, %s6, %s4
  %8 = sst [smem:[#allocation2]] %s0
  $region1: #{tpu_custom_call.1} parent=0
    #allocation3 [shape = 'u8[1024]{0}', space=smem, size = 0x400, scoped, tag = 'input window, operand 1, single buffered']
    #allocation4 [shape = 's32[1]{0}', space=sflag, size = 0x4, scoped, tag = 'scoped memory for tpu_custom_call.1']
    #allocation5 [shape = 's32[1]{0}', space=sflag, size = 0x4, scoped, tag = 'scoped memory for tpu_custom_call.1']
    #allocation6 [shape = 's32[1]{0}', space=sflag, size = 0x4, scoped, tag = 'scoped memory for tpu_custom_call.1']
    #allocation7 [shape = 'u8[8192]{0}', space=vmem, size = 0x2000, scoped, tag = 'input window, operand 2, single buffered']
    #allocation8 [shape = 'u8[12288]{0}', space=vmem, size = 0x3000, scoped, tag = 'output window, operand 0, single buffered']
    %9 = vsyncpa [#allocation6], 0
    %10 = vsyncpa [#allocation4], 0
    %11 = vsyncpa [#allocation5], 0
    // Predicated region
    $region2: #{tpu_custom_call.1} parent=1 // pred_check
      _
    $region3: #{tpu_custom_call.1} parent=1 // pred_check_branch
      %13 = sbr.rel (0) target = $region5
    $region4: #{tpu_custom_call.1} parent=1 // pred_region
      _
    $region5: #{tpu_custom_call.1} parent=1 // pred_fallthru
      _
    // Predicated region
    $region6: #{tpu_custom_call.1} parent=1 // pred_check
      _
    $region7: #{tpu_custom_call.1} parent=1 // pred_check_branch
      %15 = sbr.rel (0) target = $region9
    $region8: #{tpu_custom_call.1} parent=1 // pred_region
      %s17 = ssub.s32 32, 32
      %18 = vsyncadd [#allocation6], %s17
      %s20 = sshll.u32 %s1, 4
      %s21 = int_to_ptr.vmem [resolvable:$true] %s20
      %23 = dma.vmem_to_smem %s21, 32, [#allocation3], [#allocation6]
    $region9: #{tpu_custom_call.1} parent=1 // pred_fallthru
      _
    // Predicated region
    $region10: #{tpu_custom_call.1} parent=1 // pred_check
      _
    $region11: #{tpu_custom_call.1} parent=1 // pred_check_branch
      %25 = sbr.rel (0) target = $region13
    $region12: #{tpu_custom_call.1} parent=1 // pred_region
      %s27 = ssub.s32 256, 256
      %28 = vsyncadd [#allocation4], %s27
      %s29 = sshll.u32 [#allocation7], 4
      %s30 = int_to_ptr.vmem [resolvable:$true] %s29
      %35 = dma.hbm_to_vmem [thread:$0]  %s2, 256, %s30, [#allocation4], 128, 128, 8
    $region13: #{tpu_custom_call.1} parent=1 // pred_fallthru
      _
    // Predicated region
    $region14: #{tpu_custom_call.1} parent=1 // pred_check
      _
    $region15: #{tpu_custom_call.1} parent=1 // pred_check_branch
      %37 = sbr.rel (0) target = $region17
    $region16: #{tpu_custom_call.1} parent=1 // pred_region
      %38 = dma.done [#allocation6], 32
    $region17: #{tpu_custom_call.1} parent=1 // pred_fallthru
      _
    // Predicated region
    $region18: #{tpu_custom_call.1} parent=1 // pred_check
      _
    $region19: #{tpu_custom_call.1} parent=1 // pred_check_branch
      %40 = sbr.rel (0) target = $region21
    $region20: #{tpu_custom_call.1} parent=1 // pred_region
      %41 = dma.done [#allocation4], 256
    $region21: #{tpu_custom_call.1} parent=1 // pred_fallthru
      _
    %42 = sfence
    %v43 = vld [vmem:[#allocation7] sm:$0xff]
    %v44 = vld [vmem:[#allocation7 + $0x8] sm:$0xff]
    %s45 = sld [smem:[#allocation2]]
    %v46 = vstv %s45
    %v47 = vmul.f32 %v43, %v46
    %v48 = vmul.f32 %v44, %v46
    %v49 = vmax.f32 %v47, 0.0
    %v50 = vmax.f32 %v48, 0.0
    %v52 = vrot.slane %v49, 1
    %v55 = vrot.slane %v50, 2
    %vm57 = vcmask 1042432
    %v58 = vsel %vm57, %v49, %v52
    %vm59 = vcmask 1045504
    %v60 = vsel %vm59, %v58, %v55
    %v61 = vrot.slane %v49, 2
    %v63 = vrot.slane %v50, 3
    %v65 = vsel %vm57, %v52, %v61
    %v66 = vsel %vm59, %v65, %v63
    %v67 = vrot.slane %v49, 4
    %v69 = vrot.slane %v50, 5
    %v71 = vrot.slane %v50, 6
    %v73 = vsel %vm57, %v67, %v69
    %v74 = vsel %vm59, %v73, %v71
    %v75 = vrot.slane %v49, 5
    %v77 = vrot.slane %v50, 7
    %v79 = vsel %vm57, %v75, %v71
    %v80 = vsel %vm59, %v79, %v77
    %s81 = sld [smem:[#allocation3]]
    %v82 = vstv %s81
    %v83 = vmul.f32 %v60, %v82
    %v84 = vmul.f32 %v55, %v82
    %s85 = sld [smem:[#allocation3 + $0x1]]
    %v86 = vstv %s85
    %v87 = vmul.f32 %v66, %v86
    %v88 = vmul.f32 %v63, %v86
    %v89 = vadd.f32 %v83, %v87
    %v90 = vadd.f32 %v84, %v88
    %s91 = sld [smem:[#allocation3 + $0x2]]
    %v92 = vstv %s91
    %v93 = vmul.f32 %v74, %v92
    %v94 = vmul.f32 %v71, %v92
    %v95 = vadd.f32 %v89, %v93
    %v96 = vadd.f32 %v90, %v94
    %s97 = sld [smem:[#allocation3 + $0x3]]
    %v98 = vstv %s97
    %v99 = vmul.f32 %v80, %v98
    %v100 = vmul.f32 %v77, %v98
    %v101 = vadd.f32 %v95, %v99
    %v102 = vadd.f32 %v96, %v100
    %v103 = vmax.f32 %v101, 0.0
    %v104 = vmax.f32 %v102, 0.0
    %105 = vst [vmem:[#allocation8] sm:$0xff] %v103
    %106 = vst [vmem:[#allocation8 + $0x8] sm:$0x1] %v104
    %s107 = sld [smem:[#allocation3 + $0x80]]
    %v108 = vstv %s107
    %v109 = vmul.f32 %v60, %v108
    %v110 = vmul.f32 %v55, %v108
    %s111 = sld [smem:[#allocation3 + $0x81]]
    %v112 = vstv %s111
    %v113 = vmul.f32 %v66, %v112
    %v114 = vmul.f32 %v63, %v112
    %v115 = vadd.f32 %v109, %v113
    %v116 = vadd.f32 %v110, %v114
    %s117 = sld [smem:[#allocation3 + $0x82]]
    %v118 = vstv %s117
    %v119 = vmul.f32 %v74, %v118
    %v120 = vmul.f32 %v71, %v118
    %v121 = vadd.f32 %v115, %v119
    %v122 = vadd.f32 %v116, %v120
    %s123 = sld [smem:[#allocation3 + $0x83]]
    %v124 = vstv %s123
    %v125 = vmul.f32 %v80, %v124
    %v126 = vmul.f32 %v77, %v124
    %v127 = vadd.f32 %v121, %v125
    %v128 = vadd.f32 %v122, %v126
    %v129 = vmax.f32 %v127, 0.0
    %v130 = vmax.f32 %v128, 0.0
    %131 = vst [vmem:[#allocation8 + $0x9] sm:$0xff] %v129
    %132 = vst [vmem:[#allocation8 + $0x11] sm:$0x1] %v130
    // Predicated region
    $region22: #{tpu_custom_call.1} parent=1 // pred_check
      _
    $region23: #{tpu_custom_call.1} parent=1 // pred_check_branch
      %134 = sbr.rel (0) target = $region25
    $region24: #{tpu_custom_call.1} parent=1 // pred_region
      %s136 = ssub.s32 384, 384
      %137 = vsyncadd [#allocation5], %s136
      %s138 = sshll.u32 [#allocation8], 4
      %s139 = int_to_ptr.vmem [resolvable:$true] %s138
      %144 = dma.vmem_to_hbm [thread:$0]  %s139, 384, %s3, [#allocation5], 128, 128, 8
    $region25: #{tpu_custom_call.1} parent=1 // pred_fallthru
      _
    // Predicated region
    $region26: #{tpu_custom_call.1} parent=1 // pred_check
      _
    $region27: #{tpu_custom_call.1} parent=1 // pred_check_branch
      %146 = sbr.rel (0) target = $region29
    $region28: #{tpu_custom_call.1} parent=1 // pred_region
      %147 = dma.done [#allocation5], 384
    $region29: #{tpu_custom_call.1} parent=1 // pred_fallthru
      _
    %148 = vsyncpa [#allocation4], 1
    %149 = vsyncpa [#allocation5], 1
    %150 = vsyncpa [#allocation6], 1

</llo_original>
